<compile_context>
chip_gen: v5e
topology: v5e:2x2
jax: 0.10.0
libtpu: 0.0.40
codegen_flags: <defaults>
</compile_context>

<pallas_src>
import jax
import jax.numpy as jnp
from jax.experimental import pallas as pl
from jax.experimental.pallas import tpu as pltpu

N_CLASSES = 4
N_DIAM = 12

_DIAMETERS = jnp.array(
    [0.08, 0.1, 0.13, 0.16, 0.2, 0.25, 0.31, 0.4, 0.5, 0.63, 0.8, 1.0],
    dtype=jnp.float32,
)
_EXPONENTS = jnp.array([0.0, -1.0, -2.0, -3.0], dtype=jnp.float32)
# Hoisted contraction matrix S[i, d] = diam[d] ** exp[i], shape (4, 12).
_S = _DIAMETERS[None, :] ** _EXPONENTS[:, None]


def _round_up(n: int, m: int) -> int:
    return ((n + m - 1) // m) * m


def _cdc_kernel(x_ref, w_eff_ref, b_eff_ref, o_ref):
    # Single fused matmul: out_tile = x_tile @ W_eff + b_eff   (f32 accumulate)
    o_ref[...] = (
        jnp.dot(x_ref[...], w_eff_ref[...], preferred_element_type=jnp.float32)
        + b_eff_ref[...]
    ).astype(o_ref.dtype)


def last_layer_coeff_cdc(x, weight, bias, *, tb: int = 1024):
    """x: (B, n_input) any float dtype; weight: (n_classes, n_input); bias: (n_classes,)."""
    B, n_input = x.shape

    # Fused effective weight/bias (tiny; constant-folded under jit).
    w_eff = (weight.astype(jnp.float32).T @ _S).astype(x.dtype)   # (n_input, 12)
    b_eff = (bias.astype(jnp.float32) @ _S).reshape(1, N_DIAM)    # (1, 12) f32

    # Batch tile: multiple of 8 (f32 sublane), conservative vs v7x VMEM.
    tb = max(8, min(tb, _round_up(B, 8)))
    b_padded = _round_up(B, tb)
    if b_padded != B:
        x = jnp.pad(x, ((0, b_padded - B), (0, 0)))

    out = pl.pallas_call(
        _cdc_kernel,
        out_shape=jax.ShapeDtypeStruct((b_padded, N_DIAM), jnp.float32),
        grid_spec=pltpu.PrefetchScalarGridSpec(
            num_scalar_prefetch=0,
            grid=(b_padded // tb,),
            in_specs=[
                pl.BlockSpec((tb, n_input), lambda i: (i, 0)),       # x tile (pipelined)
                pl.BlockSpec((n_input, N_DIAM), lambda i: (0, 0)),   # W_eff, VMEM-resident
                pl.BlockSpec((1, N_DIAM), lambda i: (0, 0)),         # b_eff, VMEM-resident
            ],
            out_specs=pl.BlockSpec((tb, N_DIAM), lambda i: (i, 0)),
        ),
        compiler_params=pltpu.CompilerParams(
            dimension_semantics=("parallel",),
        ),
    )(x, w_eff, b_eff)
    return out[:B]


if __name__ == "__main__":
    key = jax.random.PRNGKey(0)
    n_input = 32

    kx, kw, kb = jax.random.split(key, 3)
    # PyTorch-style Linear init (uniform +-1/sqrt(n_input))
    bound = 1.0 / jnp.sqrt(jnp.float32(n_input))
    weight = jax.random.uniform(
        kw, (N_CLASSES, n_input), minval=-bound, maxval=bound, dtype=jnp.float32
    )
    bias = jax.random.uniform(
        kb, (N_CLASSES,), minval=-bound, maxval=bound, dtype=jnp.float32
    )

    def reference(x):
        coef = x.astype(jnp.float32) @ weight.T + bias
        return coef @ _S

    # Case 1: small batch, multiple of sublane.
    B = 8
    x = jax.random.normal(kx, (B, n_input), dtype=jnp.float32)
    out = jax.block_until_ready(last_layer_coeff_cdc(x, weight, bias))
    assert out.shape == (B, N_DIAM)
    assert jnp.allclose(out, reference(x), atol=1e-4, rtol=1e-4)

    # Case 2: batch not a multiple of the tile (exercises padding path).
    B2 = 37
    x2 = jax.random.normal(jax.random.PRNGKey(1), (B2, n_input), dtype=jnp.float32)
    out2 = jax.block_until_ready(last_layer_coeff_cdc(x2, weight, bias, tb=16))
    assert out2.shape == (B2, N_DIAM)
    assert jnp.allclose(out2, reference(x2), atol=1e-4, rtol=1e-4)

    print("KERNEL_OK")
</pallas_src>

<mosaic_0001>
module attributes {stable_mosaic.version = 11 : i64} {
  func.func @_cdc_kernel(%arg0: i32, %arg1: memref<8x32xf32, #tpu.memory_space<vmem>>, %arg2: memref<32x12xf32, #tpu.memory_space<vmem>>, %arg3: memref<1x12xf32, #tpu.memory_space<vmem>>, %arg4: memref<8x12xf32, #tpu.memory_space<vmem>>) attributes {dimension_semantics = [#tpu.dimension_semantics<parallel>], iteration_bounds = array<i64: 1>, scalar_prefetch = 0 : i64, scratch_operands = 0 : i64, tpu.core_type = #tpu.core_type<tc>, window_params = [{transform_indices = @transform_0, window_bounds = array<i64: 8, 32>}, {pipeline_mode = #tpu.pipeline_mode<synchronous>, transform_indices = @transform_1, window_bounds = array<i64: 32, 12>}, {pipeline_mode = #tpu.pipeline_mode<synchronous>, transform_indices = @transform_2, window_bounds = array<i64: 1, 12>}, {transform_indices = @transform_3, window_bounds = array<i64: 8, 12>}]} {
    %c0 = arith.constant 0 : index
    %c0_0 = arith.constant 0 : index
    %0 = vector.load %arg1[%c0, %c0_0] : memref<8x32xf32, #tpu.memory_space<vmem>>, vector<8x32xf32>
    %c0_1 = arith.constant 0 : index
    %c0_2 = arith.constant 0 : index
    %1 = vector.load %arg2[%c0_1, %c0_2] : memref<32x12xf32, #tpu.memory_space<vmem>>, vector<32x12xf32>
    %cst = arith.constant dense<0.000000e+00> : vector<8x12xf32>
    %2 = tpu.matmul %0, %1, %cst {dimension_numbers = #tpu.dot_dimension_numbers<[1], [0], [0], [1], [0, 0, 1, 1], [], []>} : vector<8x32xf32>, vector<32x12xf32>, vector<8x12xf32> -> vector<8x12xf32>
    %c0_3 = arith.constant 0 : index
    %c0_4 = arith.constant 0 : index
    %3 = vector.load %arg3[%c0_3, %c0_4] : memref<1x12xf32, #tpu.memory_space<vmem>>, vector<1x12xf32>
    %4 = vector.broadcast %3 : vector<1x12xf32> to vector<8x12xf32>
    %5 = arith.addf %2, %4 : vector<8x12xf32>
    %c0_5 = arith.constant 0 : index
    %c0_6 = arith.constant 0 : index
    %6 = vector.load %arg4[%c0_5, %c0_6] : memref<8x12xf32, #tpu.memory_space<vmem>>, vector<8x12xf32>
    tpu.vector_store %arg4[%c0_5, %c0_6], %5 {strides = array<i32>} : memref<8x12xf32, #tpu.memory_space<vmem>>, vector<8x12xf32>,
    return
  }
  func.func @transform_0(%arg0: i32) -> (i32, i32) {
    %c0_i32 = arith.constant 0 : i32
    %c0_i32_0 = arith.constant 0 : i32
    return %arg0, %c0_i32 : i32, i32
  }
  func.func @transform_1(%arg0: i32) -> (i32, i32) {
    %c0_i32 = arith.constant 0 : i32
    %c0_i32_0 = arith.constant 0 : i32
    %c0_i32_1 = arith.constant 0 : i32
    return %c0_i32, %c0_i32_0 : i32, i32
  }
  func.func @transform_2(%arg0: i32) -> (i32, i32) {
    %c0_i32 = arith.constant 0 : i32
    %c0_i32_0 = arith.constant 0 : i32
    %c0_i32_1 = arith.constant 0 : i32
    return %c0_i32, %c0_i32_0 : i32, i32
  }
  func.func @transform_3(%arg0: i32) -> (i32, i32) {
    %c0_i32 = arith.constant 0 : i32
    %c0_i32_0 = arith.constant 0 : i32
    return %arg0, %c0_i32 : i32, i32
  }
}

</mosaic_0001>

<llo_original>
// kernel: tpu_custom_call.1
$region0: #{tpu_custom_call.1}
  #allocation0 [shape = 'u32[]', space=smem, size = 0x4, offset = 0x4, fixed_abs, tag = 'smem constant byte address 0x4 - core index']
  #allocation1 [shape = 'u32[72,128]{1,0:T(1,128)}', space=vmem, size = 0x9000, scoped, tag = 'internal scratch']
  %s0 = inlined_call_operand.vmem [shape: f32[8,32], index: 0, kind: input, shape index: {}]
  %s1 = inlined_call_operand.vmem [shape: f32[32,12], index: 1, kind: input, shape index: {}]
  %s2 = inlined_call_operand.vmem [shape: f32[1,12], index: 2, kind: input, shape index: {}]
  %s3 = inlined_call_operand.hbm [shape: f32[8,12], index: 3, kind: output, shape index: {}]
  %s4 = sld [smem:[#allocation0]]
  $region22: #{tpu_custom_call.1} parent=0
    _
  %s6 = ssub.s32 1, %s4
  %s7 = scalar_select 0, %s6, %s4
  $region1: #{tpu_custom_call.1} parent=0
    #allocation2 [shape = 'u8[4096]{0}', space=vmem, size = 0x1000, scoped, tag = 'output window, operand 0, single buffered']
    #allocation3 [shape = 's32[1]{0}', space=sflag, size = 0x4, scoped, tag = 'scoped memory for tpu_custom_call.1']
    %8 = vsyncpa [#allocation3], 0
    // Predicated region
    $region2: #{tpu_custom_call.1} parent=1 // pred_check
      _
    $region3: #{tpu_custom_call.1} parent=1 // pred_check_branch
      %10 = sbr.rel (0) target = $region5
    $region4: #{tpu_custom_call.1} parent=1 // pred_region
      _
    $region5: #{tpu_custom_call.1} parent=1 // pred_fallthru
      _
    // Predicated region
    $region6: #{tpu_custom_call.1} parent=1 // pred_check
      _
    $region7: #{tpu_custom_call.1} parent=1 // pred_check_branch
      %12 = sbr.rel (0) target = $region9
    $region8: #{tpu_custom_call.1} parent=1 // pred_region
      _
    $region9: #{tpu_custom_call.1} parent=1 // pred_fallthru
      _
    // Predicated region
    $region10: #{tpu_custom_call.1} parent=1 // pred_check
      _
    $region11: #{tpu_custom_call.1} parent=1 // pred_check_branch
      %14 = sbr.rel (0) target = $region13
    $region12: #{tpu_custom_call.1} parent=1 // pred_region
      _
    $region13: #{tpu_custom_call.1} parent=1 // pred_fallthru
      _
    %v15 = vld [vmem:[%s0] sm:$0xff]
    %v16 = vld [vmem:[%s1] sm:$0xff]
    %v17 = vld [vmem:[%s1 + $0x8] sm:$0xff]
    %v18 = vld [vmem:[%s1 + $0x10] sm:$0xff]
    %v19 = vld [vmem:[%s1 + $0x18] sm:$0xff]
    %v20 = vld [vmem:[%s2] sm:$0x1]
    %v22 = vperm.slane %v20, 0
    %vm24 = vcmask 261120
    %v26 = vsel %vm24, %v15, 0
    %28 = vmatpush.msra.mxu0 0.0
    %29 = vmatpush.msra.mxu0 0.0
    %30 = vmatpush.msra.mxu0 0.0
    %31 = vmatpush.msra.mxu0 0.0
    %32 = vmatpush.msra.mxu0 0.0
    %33 = vmatpush.msra.mxu0 0.0
    %34 = vmatpush.msra.mxu0 0.0
    %35 = vmatpush.msra.mxu0 0.0
    %36 = vmatpush.msra.mxu0 0.0
    %37 = vmatpush.msra.mxu0 0.0
    %38 = vmatpush.msra.mxu0 0.0
    %39 = vmatpush.msra.mxu0 0.0
    %40 = vmatpush.msra.mxu0 %v19
    %41 = vmatpush.msra.mxu0 %v18
    %42 = vmatpush.msra.mxu0 %v17
    %43 = vmatpush.msra.mxu0 %v16
    %44 = vmatmul.f32.gmra.mxu0 %v26
    %v45 = vpop.f32.mrf.mxu0
    %v46 = vadd.f32 %v22, %v45
    %47 = vdwg.mxu0
    %vm48 = vcmask 97280
    %49 = vst.msk [vmem:[#allocation2] sm:$0xff] %vm48, %v46
    // Predicated region
    $region14: #{tpu_custom_call.1} parent=1 // pred_check
      _
    $region15: #{tpu_custom_call.1} parent=1 // pred_check_branch
      %51 = sbr.rel (0) target = $region17
    $region16: #{tpu_custom_call.1} parent=1 // pred_region
      %53 = vsyncadd [#allocation3], 0
      %s55 = sshll.u32 [#allocation2], 4
      %s56 = int_to_ptr.vmem [resolvable:$true] %s55
      %s57 = sshll.u32 %s3, 4
      %s58 = int_to_ptr.hbm [resolvable:$true] %s57
      %60 = dma.vmem_to_hbm [thread:$0]  %s56, 128, %s58, [#allocation3]
    $region17: #{tpu_custom_call.1} parent=1 // pred_fallthru
      _
    // Predicated region
    $region18: #{tpu_custom_call.1} parent=1 // pred_check
      _
    $region19: #{tpu_custom_call.1} parent=1 // pred_check_branch
      %62 = sbr.rel (0) target = $region21
    $region20: #{tpu_custom_call.1} parent=1 // pred_region
      %64 = dma.done [#allocation3], 128
    $region21: #{tpu_custom_call.1} parent=1 // pred_fallthru
      _
    %65 = vsyncpa [#allocation3], 1

</llo_original>
